<compile_context>
chip_gen: v7x
topology: tpu7x:2x2x1
jax: 0.10.0
libtpu: 0.0.40
codegen_flags: <defaults>
</compile_context>

<pallas_src>
import functools

import jax
import jax.numpy as jnp
import numpy as np
from jax import lax
from jax.experimental import pallas as pl
from jax.experimental.pallas import tpu as pltpu


# ----------------------------------------------------------------------------- kernel
def mtc_kernel(x_ref,
               wh_ref, bh_ref,      # fused stage-1 1x1 heads (branch1 + branch2/3 bottlenecks)
               w2_ref, b2_ref,      # fused stage-2 block-diagonal weight (k3 | k5 | post-pool 1x1)
               out_ref,
               *, L, c1, c2a, c3a):
    x = x_ref[...]                                   # (R, Cin) f32, R = TB * L
    R = x.shape[0]
    cdt = wh_ref.dtype                               # matmul operand dtype (f32 or bf16)

    # ---- per-sample position + boundary masks, computed once and reused by all taps
    pos = lax.broadcasted_iota(jnp.int32, (R, 1), 0) % L
    vm1 = pos >= 1                                   # tap d = -1 valid
    vp1 = pos < (L - 1)                              # tap d = +1 valid
    vm2 = pos >= 2                                   # tap d = -2 valid
    vp2 = pos < (L - 2)                              # tap d = +2 valid
    vm1f = vm1.astype(jnp.float32)
    vp1f = vp1.astype(jnp.float32)
    vm2f = vm2.astype(jnp.float32)
    vp2f = vp2.astype(jnp.float32)

    def roll_rows(h, d):
        # rolled[i] = h[(i + d) mod R]  (XLU sublane rotation, boundary handled by masks)
        return pltpu.roll(h, shift=(-d) % R, axis=0)

    # ---- stage 1: relu(x @ Wh + Bh); BN of branch1 already folded into Wh/Bh
    h = jnp.maximum(
        jnp.dot(x.astype(cdt), wh_ref[...], preferred_element_type=jnp.float32)
        + bh_ref[...],
        0.0)
    y1 = h[:, :c1]                                   # branch 1 output (conv+BN+relu)
    h2 = h[:, c1:c1 + c2a]                           # branch 2 bottleneck (conv+relu)
    h3 = h[:, c1 + c2a:c1 + c2a + c3a]               # branch 3 bottleneck (conv+relu)

    # ---- branch 4 pooling: MaxPool1d(k=3, stride=1, pad=1) with -inf padding
    xm1 = jnp.where(vm1, roll_rows(x, -1), -jnp.inf)
    xp1 = jnp.where(vp1, roll_rows(x, 1), -jnp.inf)
    m = jnp.maximum(jnp.maximum(xm1, x), xp1)

    # ---- stage 2: single fused block-diagonal matmul over
    #      [k=3 taps of h2 | k=5 taps of h3 | pooled x]
    lhs2 = jnp.concatenate([
        roll_rows(h2, -1) * vm1f, h2, roll_rows(h2, 1) * vp1f,            # k=3, pad=1
        roll_rows(h3, -2) * vm2f, roll_rows(h3, -1) * vm1f, h3,           # k=5, pad=2
        roll_rows(h3, 1) * vp1f, roll_rows(h3, 2) * vp2f,
        m,                                                                # branch-4 1x1
    ], axis=1)
    y234 = jnp.maximum(
        jnp.dot(lhs2.astype(cdt), w2_ref[...], preferred_element_type=jnp.float32)
        + b2_ref[...],
        0.0)

    # ---- single consolidated store (one assembled tile instead of 4 masked slice writes)
    out_ref[...] = jnp.concatenate([y1, y234], axis=1).astype(out_ref.dtype)


# ----------------------------------------------------------------------------- helpers
def _pick_block_batch(N, L, max_rows):
    """Samples per grid step: large blocks to amortize per-step overhead, but keep
    grid >= 2 when N >= 2 (v7x megacore + DMA/compute overlap).  Blocks always start
    on a sample boundary (R = TB * L)."""
    def legal(d):
        return N % d == 0 and ((d * L) % 8 == 0 or d == N)

    cands = [d for d in range(1, N + 1)
             if legal(d) and d * L <= max_rows and (N // d >= 2 or N == 1)]
    if cands:
        return max(cands)
    cands = [d for d in range(1, N + 1) if legal(d) and d * L <= max_rows]
    if cands:
        return max(cands)
    return N                                        # single full block is always layout-legal


# ----------------------------------------------------------------------------- wrapper
def mtc_forward(x_ncl, params, *, block_batch=None, max_rows_per_block=4096,
                use_bf16=False):
    """x_ncl: (N, C_in, L) float32 (PyTorch layout). Returns (N, C_total, L)."""
    (w1, b1, s1, t1,
     w2a, b2a, w2b, b2b, s2, t2,
     w3a, b3a, w3b, b3b, s3, t3,
     w4, b4, s4, t4) = params

    N, Cin, L = x_ncl.shape
    c1 = w1.shape[1]
    c2a, c2o = w2a.shape[1], w2b.shape[2]
    c3a, c3o = w3a.shape[1], w3b.shape[2]
    c4 = w4.shape[1]
    c_total = c1 + c2o + c3o + c4
    f32 = jnp.float32

    # ---- fold BN (inference running stats) + biases into weights/shifts (trace-time, free)
    wh = jnp.concatenate([w1 * s1, w2a, w3a], axis=1).astype(f32)
    bh = jnp.concatenate([b1 * s1 + t1, b2a, b3a], axis=1).astype(f32)

    # fused stage-2 block-diagonal weight: rows = [3*c2a (k=3 taps) | 5*c3a (k=5 taps) | Cin]
    w2f = (w2b * s2).astype(f32).reshape(3 * c2a, c2o)       # tap-major row order
    w3f = (w3b * s3).astype(f32).reshape(5 * c3a, c3o)
    w4f = (w4 * s4).astype(f32)
    rows = 3 * c2a + 5 * c3a + Cin
    cols = c2o + c3o + c4
    w2nd = jnp.zeros((rows, cols), f32)
    w2nd = w2nd.at[:3 * c2a, :c2o].set(w2f)
    w2nd = w2nd.at[3 * c2a:3 * c2a + 5 * c3a, c2o:c2o + c3o].set(w3f)
    w2nd = w2nd.at[3 * c2a + 5 * c3a:, c2o + c3o:].set(w4f)
    b2nd = jnp.concatenate(
        [b2b * s2 + t2, b3b * s3 + t3, b4 * s4 + t4], axis=1).astype(f32)

    op_dtype = jnp.bfloat16 if use_bf16 else f32
    wh_op = wh.astype(op_dtype)
    w2nd_op = w2nd.astype(op_dtype)

    # ---- channels-last, batch*length flattened onto the sublane/M axis
    x = jnp.transpose(x_ncl, (0, 2, 1)).astype(f32).reshape(N * L, Cin)

    TB = (block_batch if block_batch is not None
          else _pick_block_batch(N, L, max_rows_per_block))
    R = TB * L
    grid = (N // TB,)

    kernel = functools.partial(mtc_kernel, L=L, c1=c1, c2a=c2a, c3a=c3a)

    def const2d(a):
        return pl.BlockSpec(a.shape, lambda n: (0, 0))   # resident across grid steps

    out = pl.pallas_call(
        kernel,
        out_shape=jax.ShapeDtypeStruct((N * L, c_total), f32),
        grid_spec=pltpu.PrefetchScalarGridSpec(
            num_scalar_prefetch=0,
            grid=grid,
            in_specs=[pl.BlockSpec((R, Cin), lambda n: (n, 0)),
                      const2d(wh_op), const2d(bh),
                      const2d(w2nd_op), const2d(b2nd)],
            out_specs=pl.BlockSpec((R, c_total), lambda n: (n, 0)),
        ),
        compiler_params=pltpu.CompilerParams(
            dimension_semantics=("parallel",)),
    )(x, wh_op, bh, w2nd_op, b2nd)

    out = out.reshape(N, L, c_total)
    return jnp.transpose(out, (0, 2, 1))                  # -> (N, C_total, L)


# ----------------------------------------------------------------------------- params
def make_params(key, c_in, c1, c2, c3, c4, eps=1e-5):
    ks = iter(jax.random.split(key, 32))

    def lin(ci, co):
        w = jax.random.normal(next(ks), (ci, co), jnp.float32) * 0.2
        b = jax.random.normal(next(ks), (1, co), jnp.float32) * 0.1
        return w, b

    def conv(K, ci, co):
        w = jax.random.normal(next(ks), (K, ci, co), jnp.float32) * 0.2
        b = jax.random.normal(next(ks), (1, co), jnp.float32) * 0.1
        return w, b

    def bn(co):
        gamma = 1.0 + 0.1 * jax.random.normal(next(ks), (1, co), jnp.float32)
        beta = 0.1 * jax.random.normal(next(ks), (1, co), jnp.float32)
        mean = 0.1 * jax.random.normal(next(ks), (1, co), jnp.float32)
        var = 0.5 + jnp.abs(jax.random.normal(next(ks), (1, co), jnp.float32))
        scale = gamma / jnp.sqrt(var + eps)
        shift = beta - mean * scale
        return scale, shift

    w1, b1 = lin(c_in, c1)
    s1, t1 = bn(c1)
    w2a, b2a = lin(c_in, c2[0])
    w2b, b2b = conv(3, c2[0], c2[1])
    s2, t2 = bn(c2[1])
    w3a, b3a = lin(c_in, c3[0])
    w3b, b3b = conv(5, c3[0], c3[1])
    s3, t3 = bn(c3[1])
    w4, b4 = lin(c_in, c4)
    s4, t4 = bn(c4)

    return (w1, b1, s1, t1,
            w2a, b2a, w2b, b2b, s2, t2,
            w3a, b3a, w3b, b3b, s3, t3,
            w4, b4, s4, t4)


# ----------------------------------------------------------------------------- plain-JAX reference
def mtc_reference(x_ncl, params):
    x = jnp.transpose(x_ncl, (0, 2, 1)).astype(jnp.float32)     # (N, L, Cin)
    N, L, _ = x.shape
    (w1, b1, s1, t1,
     w2a, b2a, w2b, b2b, s2, t2,
     w3a, b3a, w3b, b3b, s3, t3,
     w4, b4, s4, t4) = params

    def lin(h, w, b):
        return jnp.einsum('nlc,cd->nld', h, w) + b

    def convk(h, w, b, pad):
        K = w.shape[0]
        hp = jnp.pad(h, ((0, 0), (pad, pad), (0, 0)))
        acc = sum(jnp.einsum('nlc,cd->nld', hp[:, k:k + L], w[k]) for k in range(K))
        return acc + b

    def bnr(y, s, t):
        return jnp.maximum(y * s + t, 0.0)

    y1 = bnr(lin(x, w1, b1), s1, t1)
    y2 = bnr(convk(jnp.maximum(lin(x, w2a, b2a), 0.0), w2b, b2b, 1), s2, t2)
    y3 = bnr(convk(jnp.maximum(lin(x, w3a, b3a), 0.0), w3b, b3b, 2), s3, t3)
    xp = jnp.pad(x, ((0, 0), (1, 1), (0, 0)), constant_values=-jnp.inf)
    m = jnp.maximum(jnp.maximum(xp[:, 0:L], xp[:, 1:L + 1]), xp[:, 2:L + 2])
    y4 = bnr(lin(m, w4, b4), s4, t4)
    y = jnp.concatenate([y1, y2, y3, y4], axis=-1)
    return jnp.transpose(y, (0, 2, 1))


# ----------------------------------------------------------------------------- main
if __name__ == "__main__":
    key = jax.random.PRNGKey(0)
    k_x, k_p = jax.random.split(key)

    N, C_in, L = 2, 4, 16
    c1, c2, c3, c4 = 8, (6, 8), (4, 8), 8

    x = jax.random.normal(k_x, (N, C_in, L), jnp.float32)
    params = make_params(k_p, C_in, c1, c2, c3, c4)

    y_ref = jax.block_until_ready(mtc_reference(x, params))
    expected_shape = (N, c1 + c2[1] + c3[1] + c4, L)

    # f32 path: strict check against the f32 reference
    y = jax.block_until_ready(mtc_forward(x, params))
    assert y.shape == expected_shape, y.shape
    np.testing.assert_allclose(np.asarray(y), np.asarray(y_ref), rtol=1e-4, atol=1e-4)

    # bf16-operand path (f32 accumulation): looser tolerance, per perf review
    y_bf16 = jax.block_until_ready(mtc_forward(x, params, use_bf16=True))
    assert y_bf16.shape == expected_shape, y_bf16.shape
    np.testing.assert_allclose(np.asarray(y_bf16), np.asarray(y_ref), rtol=3e-2, atol=3e-2)

    print("KERNEL_OK")
</pallas_src>

<mosaic_0001>
module attributes {stable_mosaic.version = 11 : i64} {
  func.func @mtc_kernel(%arg0: i32, %arg1: memref<16x4xf32, #tpu.memory_space<vmem>>, %arg2: memref<4x18xf32, #tpu.memory_space<vmem>>, %arg3: memref<1x18xf32, #tpu.memory_space<vmem>>, %arg4: memref<42x24xf32, #tpu.memory_space<vmem>>, %arg5: memref<1x24xf32, #tpu.memory_space<vmem>>, %arg6: memref<16x32xf32, #tpu.memory_space<vmem>>) attributes {dimension_semantics = [#tpu.dimension_semantics<parallel>], iteration_bounds = array<i64: 2>, scalar_prefetch = 0 : i64, scratch_operands = 0 : i64, tpu.core_type = #tpu.core_type<tc>, window_params = [{transform_indices = @transform_0, window_bounds = array<i64: 16, 4>}, {pipeline_mode = #tpu.pipeline_mode<synchronous>, transform_indices = @transform_1, window_bounds = array<i64: 4, 18>}, {pipeline_mode = #tpu.pipeline_mode<synchronous>, transform_indices = @transform_2, window_bounds = array<i64: 1, 18>}, {pipeline_mode = #tpu.pipeline_mode<synchronous>, transform_indices = @transform_3, window_bounds = array<i64: 42, 24>}, {pipeline_mode = #tpu.pipeline_mode<synchronous>, transform_indices = @transform_4, window_bounds = array<i64: 1, 24>}, {transform_indices = @transform_5, window_bounds = array<i64: 16, 32>}]} {
    %c0 = arith.constant 0 : index
    %c0_0 = arith.constant 0 : index
    %0 = vector.load %arg1[%c0, %c0_0] : memref<16x4xf32, #tpu.memory_space<vmem>>, vector<16x4xf32>
    %1 = tpu.iota {dimensions = array<i32: 0>} : vector<16x1xi32>
    %c16_i32 = arith.constant 16 : i32
    %c0_i32 = arith.constant 0 : i32
    %2 = arith.cmpi eq, %c16_i32, %c0_i32 : i32
    %c1_i32 = arith.constant 1 : i32
    %3 = arith.select %2, %c1_i32, %c16_i32 : i32
    %4 = vector.broadcast %3 : i32 to vector<16x1xi32>
    %5 = arith.remsi %1, %4 : vector<16x1xi32>
    %c0_i32_1 = arith.constant 0 : i32
    %6 = vector.broadcast %c0_i32_1 : i32 to vector<16x1xi32>
    %7 = arith.cmpi ne, %5, %6 : vector<16x1xi32>
    %c0_i32_2 = arith.constant 0 : i32
    %8 = vector.broadcast %c0_i32_2 : i32 to vector<16x1xi32>
    %9 = arith.cmpi slt, %5, %8 : vector<16x1xi32>
    %c0_i32_3 = arith.constant 0 : i32
    %10 = arith.cmpi slt, %3, %c0_i32_3 : i32
    %11 = vector.broadcast %10 : i1 to vector<16x1xi1>
    %12 = vector.broadcast %11 : vector<16x1xi1> to vector<16x1xi1>
    %13 = arith.xori %9, %12 : vector<16x1xi1>
    %14 = arith.andi %13, %7 : vector<16x1xi1>
    %15 = vector.broadcast %3 : i32 to vector<16x1xi32>
    %16 = arith.addi %5, %15 : vector<16x1xi32>
    %17 = arith.select %14, %16, %5 : vector<16x1xi1>, vector<16x1xi32>
    %c1_i32_4 = arith.constant 1 : i32
    %18 = vector.broadcast %c1_i32_4 : i32 to vector<16x1xi32>
    %19 = arith.cmpi sge, %17, %18 : vector<16x1xi32>
    %c15_i32 = arith.constant 15 : i32
    %20 = vector.broadcast %c15_i32 : i32 to vector<16x1xi32>
    %21 = arith.cmpi slt, %17, %20 : vector<16x1xi32>
    %c2_i32 = arith.constant 2 : i32
    %22 = vector.broadcast %c2_i32 : i32 to vector<16x1xi32>
    %23 = arith.cmpi sge, %17, %22 : vector<16x1xi32>
    %c14_i32 = arith.constant 14 : i32
    %24 = vector.broadcast %c14_i32 : i32 to vector<16x1xi32>
    %25 = arith.cmpi slt, %17, %24 : vector<16x1xi32>
    %26 = arith.extui %19 : vector<16x1xi1> to vector<16x1xi32>
    %27 = arith.sitofp %26 : vector<16x1xi32> to vector<16x1xf32>
    %28 = arith.extui %21 : vector<16x1xi1> to vector<16x1xi32>
    %29 = arith.sitofp %28 : vector<16x1xi32> to vector<16x1xf32>
    %30 = arith.extui %23 : vector<16x1xi1> to vector<16x1xi32>
    %31 = arith.sitofp %30 : vector<16x1xi32> to vector<16x1xf32>
    %32 = arith.extui %25 : vector<16x1xi1> to vector<16x1xi32>
    %33 = arith.sitofp %32 : vector<16x1xi32> to vector<16x1xf32>
    %c0_5 = arith.constant 0 : index
    %c0_6 = arith.constant 0 : index
    %34 = vector.load %arg2[%c0_5, %c0_6] : memref<4x18xf32, #tpu.memory_space<vmem>>, vector<4x18xf32>
    %cst = arith.constant dense<0.000000e+00> : vector<16x18xf32>
    %35 = tpu.matmul %0, %34, %cst {dimension_numbers = #tpu.dot_dimension_numbers<[1], [0], [0], [1], [0, 0, 1, 1], [], []>} : vector<16x4xf32>, vector<4x18xf32>, vector<16x18xf32> -> vector<16x18xf32>
    %c0_7 = arith.constant 0 : index
    %c0_8 = arith.constant 0 : index
    %36 = vector.load %arg3[%c0_7, %c0_8] : memref<1x18xf32, #tpu.memory_space<vmem>>, vector<1x18xf32>
    %37 = vector.broadcast %36 : vector<1x18xf32> to vector<16x18xf32>
    %38 = arith.addf %35, %37 : vector<16x18xf32>
    %cst_9 = arith.constant 0.000000e+00 : f32
    %39 = vector.broadcast %cst_9 : f32 to vector<16x18xf32>
    %40 = arith.maximumf %38, %39 : vector<16x18xf32>
    %41 = vector.extract_strided_slice %40 {offsets = [0, 0], sizes = [16, 8], strides = [1, 1]} : vector<16x18xf32> to vector<16x8xf32>
    %42 = vector.extract_strided_slice %40 {offsets = [0, 8], sizes = [16, 6], strides = [1, 1]} : vector<16x18xf32> to vector<16x6xf32>
    %43 = vector.extract_strided_slice %40 {offsets = [0, 14], sizes = [16, 4], strides = [1, 1]} : vector<16x18xf32> to vector<16x4xf32>
    %c1_i32_10 = arith.constant 1 : i32
    %44 = tpu.dynamic_rotate %0 by %c1_i32_10 dim 0 : vector<16x4xf32>, i32 -> vector<16x4xf32>
    %cst_11 = arith.constant 0xFF800000 : f32
    %45 = vector.shape_cast %19 : vector<16x1xi1> to vector<16x1xi1>
    %46 = vector.broadcast %45 : vector<16x1xi1> to vector<16x4xi1>
    %47 = vector.broadcast %cst_11 : f32 to vector<16x4xf32>
    %48 = arith.select %46, %44, %47 : vector<16x4xi1>, vector<16x4xf32>
    %c15_i32_12 = arith.constant 15 : i32
    %49 = tpu.dynamic_rotate %0 by %c15_i32_12 dim 0 : vector<16x4xf32>, i32 -> vector<16x4xf32>
    %cst_13 = arith.constant 0xFF800000 : f32
    %50 = vector.shape_cast %21 : vector<16x1xi1> to vector<16x1xi1>
    %51 = vector.broadcast %50 : vector<16x1xi1> to vector<16x4xi1>
    %52 = vector.broadcast %cst_13 : f32 to vector<16x4xf32>
    %53 = arith.select %51, %49, %52 : vector<16x4xi1>, vector<16x4xf32>
    %54 = arith.maximumf %48, %0 : vector<16x4xf32>
    %55 = arith.maximumf %54, %53 : vector<16x4xf32>
    %c1_i32_14 = arith.constant 1 : i32
    %56 = tpu.dynamic_rotate %42 by %c1_i32_14 dim 0 : vector<16x6xf32>, i32 -> vector<16x6xf32>
    %57 = vector.broadcast %27 : vector<16x1xf32> to vector<16x6xf32>
    %58 = arith.mulf %56, %57 : vector<16x6xf32>
    %c15_i32_15 = arith.constant 15 : i32
    %59 = tpu.dynamic_rotate %42 by %c15_i32_15 dim 0 : vector<16x6xf32>, i32 -> vector<16x6xf32>
    %60 = vector.broadcast %29 : vector<16x1xf32> to vector<16x6xf32>
    %61 = arith.mulf %59, %60 : vector<16x6xf32>
    %c2_i32_16 = arith.constant 2 : i32
    %62 = tpu.dynamic_rotate %43 by %c2_i32_16 dim 0 : vector<16x4xf32>, i32 -> vector<16x4xf32>
    %63 = vector.broadcast %31 : vector<16x1xf32> to vector<16x4xf32>
    %64 = arith.mulf %62, %63 : vector<16x4xf32>
    %c1_i32_17 = arith.constant 1 : i32
    %65 = tpu.dynamic_rotate %43 by %c1_i32_17 dim 0 : vector<16x4xf32>, i32 -> vector<16x4xf32>
    %66 = vector.broadcast %27 : vector<16x1xf32> to vector<16x4xf32>
    %67 = arith.mulf %65, %66 : vector<16x4xf32>
    %c15_i32_18 = arith.constant 15 : i32
    %68 = tpu.dynamic_rotate %43 by %c15_i32_18 dim 0 : vector<16x4xf32>, i32 -> vector<16x4xf32>
    %69 = vector.broadcast %29 : vector<16x1xf32> to vector<16x4xf32>
    %70 = arith.mulf %68, %69 : vector<16x4xf32>
    %c14_i32_19 = arith.constant 14 : i32
    %71 = tpu.dynamic_rotate %43 by %c14_i32_19 dim 0 : vector<16x4xf32>, i32 -> vector<16x4xf32>
    %72 = vector.broadcast %33 : vector<16x1xf32> to vector<16x4xf32>
    %73 = arith.mulf %71, %72 : vector<16x4xf32>
    %74 = tpu.concatenate %58, %42, %61, %64, %67, %43, %70, %73, %55 in 1 : vector<16x6xf32>, vector<16x6xf32>, vector<16x6xf32>, vector<16x4xf32>, vector<16x4xf32>, vector<16x4xf32>, vector<16x4xf32>, vector<16x4xf32>, vector<16x4xf32> -> vector<16x42xf32>
    %c0_20 = arith.constant 0 : index
    %c0_21 = arith.constant 0 : index
    %75 = vector.load %arg4[%c0_20, %c0_21] : memref<42x24xf32, #tpu.memory_space<vmem>>, vector<42x24xf32>
    %cst_22 = arith.constant dense<0.000000e+00> : vector<16x24xf32>
    %76 = tpu.matmul %74, %75, %cst_22 {dimension_numbers = #tpu.dot_dimension_numbers<[1], [0], [0], [1], [0, 0, 1, 1], [], []>} : vector<16x42xf32>, vector<42x24xf32>, vector<16x24xf32> -> vector<16x24xf32>
    %c0_23 = arith.constant 0 : index
    %c0_24 = arith.constant 0 : index
    %77 = vector.load %arg5[%c0_23, %c0_24] : memref<1x24xf32, #tpu.memory_space<vmem>>, vector<1x24xf32>
    %78 = vector.broadcast %77 : vector<1x24xf32> to vector<16x24xf32>
    %79 = arith.addf %76, %78 : vector<16x24xf32>
    %cst_25 = arith.constant 0.000000e+00 : f32
    %80 = vector.broadcast %cst_25 : f32 to vector<16x24xf32>
    %81 = arith.maximumf %79, %80 : vector<16x24xf32>
    %82 = tpu.concatenate %41, %81 in 1 : vector<16x8xf32>, vector<16x24xf32> -> vector<16x32xf32>
    %c0_26 = arith.constant 0 : index
    %c0_27 = arith.constant 0 : index
    %83 = vector.load %arg6[%c0_26, %c0_27] : memref<16x32xf32, #tpu.memory_space<vmem>>, vector<16x32xf32>
    tpu.vector_store %arg6[%c0_26, %c0_27], %82 {strides = array<i32>} : memref<16x32xf32, #tpu.memory_space<vmem>>, vector<16x32xf32>,
    return
  }
  func.func @transform_0(%arg0: i32) -> (i32, i32) {
    %c0_i32 = arith.constant 0 : i32
    %c0_i32_0 = arith.constant 0 : i32
    return %arg0, %c0_i32 : i32, i32
  }
  func.func @transform_1(%arg0: i32) -> (i32, i32) {
    %c0_i32 = arith.constant 0 : i32
    %c0_i32_0 = arith.constant 0 : i32
    %c0_i32_1 = arith.constant 0 : i32
    return %c0_i32, %c0_i32_0 : i32, i32
  }
  func.func @transform_2(%arg0: i32) -> (i32, i32) {
    %c0_i32 = arith.constant 0 : i32
    %c0_i32_0 = arith.constant 0 : i32
    %c0_i32_1 = arith.constant 0 : i32
    return %c0_i32, %c0_i32_0 : i32, i32
  }
  func.func @transform_3(%arg0: i32) -> (i32, i32) {
    %c0_i32 = arith.constant 0 : i32
    %c0_i32_0 = arith.constant 0 : i32
    %c0_i32_1 = arith.constant 0 : i32
    return %c0_i32, %c0_i32_0 : i32, i32
  }
  func.func @transform_4(%arg0: i32) -> (i32, i32) {
    %c0_i32 = arith.constant 0 : i32
    %c0_i32_0 = arith.constant 0 : i32
    %c0_i32_1 = arith.constant 0 : i32
    return %c0_i32, %c0_i32_0 : i32, i32
  }
  func.func @transform_5(%arg0: i32) -> (i32, i32) {
    %c0_i32 = arith.constant 0 : i32
    %c0_i32_0 = arith.constant 0 : i32
    return %arg0, %c0_i32 : i32, i32
  }
}

</mosaic_0001>

<llo_original>
// kernel: tpu_custom_call.1
$region0: #{tpu_custom_call.1}
  #allocation0 [shape = 'u32[]', space=smem, size = 0x4, offset = 0x4, fixed_abs, tag = 'smem constant byte address 0x4 - core index']
  #allocation1 [shape = 'u32[144,128]{1,0:T(1,128)}', space=vmem, size = 0x12000, scoped, tag = 'internal scratch']
  %s0 = inlined_call_operand.vmem [shape: f32[32,4], index: 0, kind: input, shape index: {}]
  %s1 = inlined_call_operand.vmem [shape: f32[4,18], index: 1, kind: input, shape index: {}]
  %s2 = inlined_call_operand.vmem [shape: f32[1,18], index: 2, kind: input, shape index: {}]
  %s3 = inlined_call_operand.vmem [shape: f32[42,24], index: 3, kind: input, shape index: {}]
  %s4 = inlined_call_operand.vmem [shape: f32[1,24], index: 4, kind: input, shape index: {}]
  %s5 = inlined_call_operand.hbm [shape: f32[32,32], index: 5, kind: output, shape index: {}]
  %s6 = sld [smem:[#allocation0]]
  $region53: #{tpu_custom_call.1} parent=0
    _
  %s8 = ssub.s32 1, %s6
  %s9 = scalar_select 0, %s8, %s6
  $region1: #{tpu_custom_call.1} parent=0
    #allocation2 [shape = 'u8[16384]{0}', space=vmem, size = 0x4000, scoped, tag = 'output window, operand 0']
    #allocation3 [shape = 's32[2]{0}', space=sflag, size = 0x8, scoped, tag = 'scoped memory for tpu_custom_call.1']
    %10 = vsyncpa [#allocation3], 0
    %s11 = scalar_lea.sflag [#allocation3], 1
    %12 = vsyncpa %s11, 0
    loop: start=0, step=1, limit=4
    $region2: #{tpu_custom_call.1} parent=1 // loop_pre_header
      _
    $region3: #{tpu_custom_call.1} parent=1 // loop_header
      %s14 = sphi 0, %s18
      %p15 = scmp.ge.s32.totalorder %s14, 4
      %s24 = sphi 0, %s26
      %s27 = sphi 0, %s24
      %s28 = sphi 0, %s27
      %s44 = sphi 0, %s28
      %s48 = sphi 0, %s48
      %s50 = sphi 0, %s48
      %s51 = sphi 0, %s50
      %s65 = sphi 0, %s51
      %s69 = sphi 0, %s69
      %s71 = sphi 0, %s69
      %s72 = sphi 0, %s71
      %s86 = sphi 0, %s72
      %s90 = sphi 0, %s90
      %s92 = sphi 0, %s90
      %s93 = sphi 0, %s92
      %s107 = sphi 0, %s93
      %s111 = sphi 0, %s111
      %s113 = sphi 0, %s111
      %s114 = sphi 0, %s113
      %s128 = sphi 0, %s114
      %s134 = sphi 0, %s136
      %s137 = sphi 0, %s134
      %s138 = sphi 0, %s137
      %s154 = sphi 0, %s138
    $region4: #{tpu_custom_call.1} parent=1 // loop_header_branch
      %17 = sbr.rel (%p15) target = $region8
    $region5: #{tpu_custom_call.1} parent=1 // loop_body
      %s19 = ssub.s32 %s14, 1
      %s20 = ssub.s32 %s14, 2
      %s21 = sadd.s32 %s14, 1
      %s22 = ssub.s32 %s14, %s21
      %p23 = scmp.eq.s32.totalorder %s22, 0
      %s25 = sadd.s32 %s24, 1
      %s26 = scalar_select %p23, %s24, %s25
      %p29 = pneg %p23
      %p30 = scmp.eq.s32.totalorder %s14, 1
      %p31 = por %p29, %p30
      %p32 = scmp.ne.s32.totalorder %s24, %s27
      %p33 = scmp.eq.s32.totalorder %s14, 0
      %p34 = por %p32, %p33
      %p35 = scmp.ne.s32.totalorder %s24, %s27
      %p36 = scmp.eq.s32.totalorder %s19, 1
      %p37 = por %p35, %p36
      %p38 = scmp.ne.s32.totalorder %s27, %s28
      %p39 = scmp.eq.s32.totalorder %s19, 0
      %p40 = por %p38, %p39
      %p41 = scmp.ne.s32.totalorder %s27, %s28
      %p42 = scmp.eq.s32.totalorder %s20, 1
      %p43 = por %p41, %p42
      %p45 = scmp.ne.s32.totalorder %s28, %s44
      %p46 = scmp.eq.s32.totalorder %s20, 0
      %p47 = por %p45, %p46
      %s49 = sadd.s32 %s48, 1
      %p52 = scmp.eq.s32.totalorder %s14, 1
      %p53 = scmp.ne.s32.totalorder %s48, %s50
      %p54 = scmp.eq.s32.totalorder %s14, 0
      %p55 = por %p53, %p54
      %p56 = scmp.ne.s32.totalorder %s48, %s50
      %p57 = scmp.eq.s32.totalorder %s19, 1
      %p58 = por %p56, %p57
      %p59 = scmp.ne.s32.totalorder %s50, %s51
      %p60 = scmp.eq.s32.totalorder %s19, 0
      %p61 = por %p59, %p60
      %p62 = scmp.ne.s32.totalorder %s50, %s51
      %p63 = scmp.eq.s32.totalorder %s20, 1
      %p64 = por %p62, %p63
      %p66 = scmp.ne.s32.totalorder %s51, %s65
      %p67 = scmp.eq.s32.totalorder %s20, 0
      %p68 = por %p66, %p67
      %s70 = sadd.s32 %s69, 1
      %p73 = scmp.eq.s32.totalorder %s14, 1
      %p74 = scmp.ne.s32.totalorder %s69, %s71
      %p75 = scmp.eq.s32.totalorder %s14, 0
      %p76 = por %p74, %p75
      %p77 = scmp.ne.s32.totalorder %s69, %s71
      %p78 = scmp.eq.s32.totalorder %s19, 1
      %p79 = por %p77, %p78
      %p80 = scmp.ne.s32.totalorder %s71, %s72
      %p81 = scmp.eq.s32.totalorder %s19, 0
      %p82 = por %p80, %p81
      %p83 = scmp.ne.s32.totalorder %s71, %s72
      %p84 = scmp.eq.s32.totalorder %s20, 1
      %p85 = por %p83, %p84
      %p87 = scmp.ne.s32.totalorder %s72, %s86
      %p88 = scmp.eq.s32.totalorder %s20, 0
      %p89 = por %p87, %p88
      %s91 = sadd.s32 %s90, 1
      %p94 = scmp.eq.s32.totalorder %s14, 1
      %p95 = scmp.ne.s32.totalorder %s90, %s92
      %p96 = scmp.eq.s32.totalorder %s14, 0
      %p97 = por %p95, %p96
      %p98 = scmp.ne.s32.totalorder %s90, %s92
      %p99 = scmp.eq.s32.totalorder %s19, 1
      %p100 = por %p98, %p99
      %p101 = scmp.ne.s32.totalorder %s92, %s93
      %p102 = scmp.eq.s32.totalorder %s19, 0
      %p103 = por %p101, %p102
      %p104 = scmp.ne.s32.totalorder %s92, %s93
      %p105 = scmp.eq.s32.totalorder %s20, 1
      %p106 = por %p104, %p105
      %p108 = scmp.ne.s32.totalorder %s93, %s107
      %p109 = scmp.eq.s32.totalorder %s20, 0
      %p110 = por %p108, %p109
      %s112 = sadd.s32 %s111, 1
      %p115 = scmp.eq.s32.totalorder %s14, 1
      %p116 = scmp.ne.s32.totalorder %s111, %s113
      %p117 = scmp.eq.s32.totalorder %s14, 0
      %p118 = por %p116, %p117
      %p119 = scmp.ne.s32.totalorder %s111, %s113
      %p120 = scmp.eq.s32.totalorder %s19, 1
      %p121 = por %p119, %p120
      %p122 = scmp.ne.s32.totalorder %s113, %s114
      %p123 = scmp.eq.s32.totalorder %s19, 0
      %p124 = por %p122, %p123
      %p125 = scmp.ne.s32.totalorder %s113, %s114
      %p126 = scmp.eq.s32.totalorder %s20, 1
      %p127 = por %p125, %p126
      %p129 = scmp.ne.s32.totalorder %s114, %s128
      %p130 = scmp.eq.s32.totalorder %s20, 0
      %p131 = por %p129, %p130
      %s132 = ssub.s32 %s14, %s21
      %p133 = scmp.eq.s32.totalorder %s132, 0
      %s135 = sadd.s32 %s134, 1
      %s136 = scalar_select %p133, %s134, %s135
      %p139 = pneg %p133
      %p140 = scmp.eq.s32.totalorder %s14, 1
      %p141 = por %p139, %p140
      %p142 = scmp.ne.s32.totalorder %s134, %s137
      %p143 = scmp.eq.s32.totalorder %s14, 0
      %p144 = por %p142, %p143
      %p145 = scmp.ne.s32.totalorder %s134, %s137
      %p146 = scmp.eq.s32.totalorder %s19, 1
      %p147 = por %p145, %p146
      %p148 = scmp.ne.s32.totalorder %s137, %s138
      %p149 = scmp.eq.s32.totalorder %s19, 0
      %p150 = por %p148, %p149
      %p151 = scmp.ne.s32.totalorder %s137, %s138
      %p152 = scmp.eq.s32.totalorder %s20, 1
      %p153 = por %p151, %p152
      %p155 = scmp.ne.s32.totalorder %s138, %s154
      %p156 = scmp.eq.s32.totalorder %s20, 0
      %p157 = por %p155, %p156
      %p158 = scmp.le.s32.totalorder 1, %s14
      %p159 = scmp.lt.s32.totalorder %s14, 3
      %p160 = pnand %p158, %p159
      %p161 = pneg %p160
      // Predicated region
      $region9: #{tpu_custom_call.1} parent=5 // pred_check
        _
      $region10: #{tpu_custom_call.1} parent=5 // pred_check_branch
        %163 = sbr.rel (%p160) target = $region12
      $region11: #{tpu_custom_call.1} parent=5 // pred_region
        %s164 = ssub.s32 %s14, 1
        // Predicated region
        $region13: #{tpu_custom_call.1} parent=11 // pred_check
          %p165 = pneg %p61
        $region14: #{tpu_custom_call.1} parent=11 // pred_check_branch
          %167 = sbr.rel (%p165) target = $region16
        $region15: #{tpu_custom_call.1} parent=11 // pred_region
          _
        $region16: #{tpu_custom_call.1} parent=11 // pred_fallthru
          _
        // Predicated region
        $region17: #{tpu_custom_call.1} parent=11 // pred_check
          %p168 = pneg %p82
        $region18: #{tpu_custom_call.1} parent=11 // pred_check_branch
          %170 = sbr.rel (%p168) target = $region20
        $region19: #{tpu_custom_call.1} parent=11 // pred_region
          _
        $region20: #{tpu_custom_call.1} parent=11 // pred_fallthru
          _
        // Predicated region
        $region21: #{tpu_custom_call.1} parent=11 // pred_check
          %p171 = pneg %p103
        $region22: #{tpu_custom_call.1} parent=11 // pred_check_branch
          %173 = sbr.rel (%p171) target = $region24
        $region23: #{tpu_custom_call.1} parent=11 // pred_region
          _
        $region24: #{tpu_custom_call.1} parent=11 // pred_fallthru
          _
        // Predicated region
        $region25: #{tpu_custom_call.1} parent=11 // pred_check
          %p174 = pneg %p124
        $region26: #{tpu_custom_call.1} parent=11 // pred_check_branch
          %176 = sbr.rel (%p174) target = $region28
        $region27: #{tpu_custom_call.1} parent=11 // pred_region
          _
        $region28: #{tpu_custom_call.1} parent=11 // pred_fallthru
          _
      $region12: #{tpu_custom_call.1} parent=5 // pred_fallthru
        _
      %p177 = scmp.lt.s32.totalorder %s14, 2
      // Predicated region
      $region29: #{tpu_custom_call.1} parent=5 // pred_check
        %p178 = pneg %p177
      $region30: #{tpu_custom_call.1} parent=5 // pred_check_branch
        %180 = sbr.rel (%p178) target = $region32
      $region31: #{tpu_custom_call.1} parent=5 // pred_region
        // Predicated region
        $region33: #{tpu_custom_call.1} parent=31 // pred_check
          %p181 = pneg %p34
        $region34: #{tpu_custom_call.1} parent=31 // pred_check_branch
          %183 = sbr.rel (%p181) target = $region36
        $region35: #{tpu_custom_call.1} parent=31 // pred_region
          %s184 = smul.u32 2, %s14
          %p185 = scmp.lt.s32.totalorder %s184, 3
          %s186 = scalar_select %p185, %s184, 3
          %s187 = smul.addr %s186, 8
          %s188 = scalar_lea.vmem %s0, %s187
          %s189 = smul.u32 2, %s14
        $region36: #{tpu_custom_call.1} parent=31 // pred_fallthru
          _
      $region32: #{tpu_custom_call.1} parent=5 // pred_fallthru
        _
      %p190 = scmp.le.s32.totalorder 1, %s14
      %p191 = scmp.lt.s32.totalorder %s14, 3
      %p192 = pnand %p190, %p191
      %p193 = pneg %p192
      // Predicated region
      $region37: #{tpu_custom_call.1} parent=5 // pred_check
        _
      $region38: #{tpu_custom_call.1} parent=5 // pred_check_branch
        %195 = sbr.rel (%p192) target = $region40
      $region39: #{tpu_custom_call.1} parent=5 // pred_region
        %s196 = ssub.s32 %s14, 1
        %s197 = smul.u32 2, %s19
        %p198 = scmp.lt.s32.totalorder %s197, 3
        %s199 = scalar_select %p198, %s197, 3
        %s200 = smul.addr %s199, 8
        %s201 = scalar_lea.vmem %s0, %s200
        %p202 = pneg %p40
        %p203 = pneg %p37
        %p204 = pneg %p61
        %p205 = pneg %p58
        %p206 = pneg %p82
        %p207 = pneg %p79
        %p208 = pneg %p103
        %p209 = pneg %p100
        %p210 = pneg %p124
        %p211 = pneg %p121
        %p212 = pneg %p150
        %p213 = pneg %p147
        %s214 = sand.u32 %s137, 1
        %s215 = scalar_lea.sflag [#allocation3], %s214
        %s216 = sand.u32 %s137, 1
        %s217 = smul.addr %s216, 16
        %s218 = scalar_lea.vmem [#allocation2], %s217
        %s219 = smul.u32 2, %s19
        %p220 = scmp.lt.s32.totalorder %s219, 3
        %s221 = scalar_select %p220, %s219, 3
        %s222 = smul.addr %s221, 8
        %s223 = scalar_lea.vmem %s0, %s222
        %s224 = smul.u32 2, %s19
        %s225 = smul.u32 2, %s19
        %v226 = vld [vmem:[%s223] sm:$0xff]
        %v227 = vld [vmem:[%s223 + $0x8] sm:$0xff]
        %v228 = vlaneseq
        %v229 = vshrl.u32 %v228, 7
        %v230 = vadd.s32 %v229, 8
        %vm231 = vcmp.lt.s32.totalorder %v229, 0
        %v232 = vsub.s32 0, %v229
        %v233 = vsel %vm231, %v232, %v229
        %v234 = vshrl.u32 %v233, 4
        %v235 = vand.u32 %v233, 15
        %v236 = vsub.s32 0, %v235
        %v237 = vsel %vm231, %v236, %v235
        %vm238 = vcmp.lt.s32.totalorder %v230, 0
        %v239 = vsub.s32 0, %v230
        %v240 = vsel %vm238, %v239, %v230
        %v241 = vshrl.u32 %v240, 4
        %v242 = vand.u32 %v240, 15
        %v243 = vsub.s32 0, %v242
        %v244 = vsel %vm238, %v243, %v242
        %vm245 = vcmp.ne.s32.totalorder %v237, 0
        %vm246 = vcmp.ne.s32.totalorder %v244, 0
        %vm247 = vcmp.lt.s32.totalorder %v237, 0
        %vm248 = vcmp.lt.s32.totalorder %v244, 0
        %vm249 = vmand %vm247, %vm245
        %vm250 = vmand %vm248, %vm246
        %v251 = vadd.s32 %v237, 16
        %v252 = vadd.s32 %v244, 16
        %v253 = vsel %vm249, %v251, %v237
        %v254 = vsel %vm250, %v252, %v244
        %vm255 = vcmp.ge.s32.totalorder %v253, 1
        %vm256 = vcmp.ge.s32.totalorder %v254, 1
        %vm257 = vcmp.lt.s32.totalorder %v253, 15
        %vm258 = vcmp.lt.s32.totalorder %v254, 15
        %vm259 = vcmp.ge.s32.totalorder %v253, 2
        %vm260 = vcmp.ge.s32.totalorder %v254, 2
        %vm261 = vcmp.lt.s32.totalorder %v253, 14
        %vm262 = vcmp.lt.s32.totalorder %v254, 14
        %v263 = vsel %vm255, 1, 0
        %v264 = vsel %vm256, 1, 0
        %v265 = vcvt.s32.f32 %v263
        %v266 = vcvt.s32.f32 %v264
        %v267 = vsel %vm257, 1, 0
        %v268 = vsel %vm258, 1, 0
        %v269 = vcvt.s32.f32 %v267
        %v270 = vcvt.s32.f32 %v268
        %v271 = vsel %vm259, 1, 0
        %v272 = vsel %vm260, 1, 0
        %v273 = vcvt.s32.f32 %v271
        %v274 = vcvt.s32.f32 %v272
        %v275 = vsel %vm261, 1, 0
        %v276 = vsel %vm262, 1, 0
        %v277 = vcvt.s32.f32 %v275
        %v278 = vcvt.s32.f32 %v276
        %v279 = vld [vmem:[%s1] sm:$0xf]
        %v280 = vld [vmem:[%s2] sm:$0x1]
        %v282 = vlaneseq
        %v283 = vshrl.u32 %v282, 7
        %v284 = vsub.s32 0, %v283
        %v285 = vrot.slane %v280, %v284
        %vm287 = vcmask 31744
        %v289 = vsel %vm287, %v226, 0
        %v292 = vsel %vm287, %v227, 0
        %vm294 = vcmask 1043456
        %v296 = vsel %vm294, %v279, 0
        %298 = vmatprep.subr.mxu0 0.0
        %299 = vmatpush1.msra.mxu0 %v296
        %300 = vmatprep.subr.mxu0 0.0
        %301 = vmatpush1.msra.mxu0 0.0
        %302 = vmatprep.subr.mxu0 0.0
        %303 = vmatpush1.msra.mxu0 0.0
        %304 = vmatprep.subr.mxu0 0.0
        %305 = vmatpush1.msra.mxu0 0.0
        %306 = vmatprep.subr.mxu0 0.0
        %307 = vmatpush1.msra.mxu0 0.0
        %308 = vmatprep.subr.mxu0 0.0
        %309 = vmatpush1.msra.mxu0 0.0
        %310 = vmatprep.subr.mxu0 0.0
        %311 = vmatpush1.msra.mxu0 0.0
        %312 = vmatprep.subr.mxu0 0.0
        %313 = vmatpush1.msra.mxu0 0.0
        %314 = vmatprep.subr.mxu0 0.0
        %315 = vmatpush1.msra.mxu0 0.0
        %316 = vmatprep.subr.mxu0 0.0
        %317 = vmatpush1.msra.mxu0 0.0
        %318 = vmatprep.subr.mxu0 0.0
        %319 = vmatpush1.msra.mxu0 0.0
        %320 = vmatprep.subr.mxu0 0.0
        %321 = vmatpush1.msra.mxu0 0.0
        %322 = vmatprep.subr.mxu0 0.0
        %323 = vmatpush1.msra.mxu0 0.0
        %324 = vmatprep.subr.mxu0 0.0
        %325 = vmatpush1.msra.mxu0 0.0
        %326 = vmatprep.subr.mxu0 0.0
        %327 = vmatpush1.msra.mxu0 0.0
        %328 = vmatprep.subr.mxu0 0.0
        %329 = vmatpush1.msra.mxu0 0.0
        %330 = vmatprep.subr.mxu0 0.0
        %331 = vmatpush1.msra.mxu0 0.0
        %332 = vmatprep.subr.mxu0 0.0
        %333 = vmatpush1.msra.mxu0 0.0
        %334 = vmatprep.subr.mxu0 0.0
        %335 = vmatpush1.msra.mxu0 0.0
        %336 = vmatprep.subr.mxu0 0.0
        %337 = vmatpush1.msra.mxu0 0.0
        %338 = vmatprep.subr.mxu0 0.0
        %339 = vmatpush1.msra.mxu0 0.0
        %340 = vmatprep.subr.mxu0 0.0
        %341 = vmatpush1.msra.mxu0 0.0
        %342 = vmatprep.subr.mxu0 0.0
        %343 = vmatpush1.msra.mxu0 0.0
        %344 = vmatprep.subr.mxu0 0.0
        %345 = vmatpush1.msra.mxu0 0.0
        %346 = vmatprep.subr.mxu0 0.0
        %347 = vmatpush1.msra.mxu0 0.0
        %348 = vmatprep.subr.mxu0 0.0
        %349 = vmatpush1.msra.mxu0 0.0
        %350 = vmatprep.subr.mxu0 0.0
        %351 = vmatpush1.msra.mxu0 0.0
        %352 = vmatprep.subr.mxu0 0.0
        %353 = vmatpush1.msra.mxu0 0.0
        %354 = vmatprep.subr.mxu0 0.0
        %355 = vmatpush1.msra.mxu0 0.0
        %356 = vmatprep.subr.mxu0 0.0
        %357 = vmatpush1.msra.mxu0 0.0
        %358 = vmatprep.subr.mxu0 0.0
        %359 = vmatpush1.msra.mxu0 0.0
        %360 = vmatprep.subr.mxu0 0.0
        %361 = vmatpush1.msra.mxu0 0.0
        %362 = vmatprep.mubr.f32.mxu0 0.0
        %363 = vmatmul.mubr.f32.gmra.mrb[0].mxu0 %v289
        %v364 = vpop.f32.mrb[0].mxu0
        %v365 = vadd.f32 %v285, %v364
        %v366 = vpop.f32.mrb[0].mxu0
        %367 = vmatprep.mubr.f32.mxu0 0.0
        %368 = vmatmul.mubr.f32.gmra.mrb[0].mxu0 %v292
        %v369 = vpop.f32.mrb[0].mxu0
        %v370 = vadd.f32 %v285, %v369
        %v371 = vpop.f32.mrb[0].mxu0
        %372 = vdwg.mxu0
        %v373 = vmax.f32 %v365, 0.0
        %v374 = vmax.f32 %v370, 0.0
        %v375 = vrot.slane %v226, 7
        %v376 = vrot.slane %v227, 7
        %vm377 = vcmp.lt.s32.totalorder %v229, 1
        %v378 = vsel %vm377, %v375, %v376
        %v379 = vsel %vm377, %v376, %v375
        %vm380 = vcmp.eq.s32.totalorder %v263, 1
        %vm381 = vcmp.eq.s32.totalorder %v264, 1
        %v382 = vsel %vm380, %v379, -inf
        %v383 = vsel %vm381, %v378, -inf
        %v384 = vrot.slane %v226, 1
        %v385 = vrot.slane %v227, 1
        %vm386 = vcmp.lt.s32.totalorder %v229, 7
        %v387 = vsel %vm386, %v384, %v385
        %v388 = vsel %vm386, %v385, %v384
        %vm389 = vcmp.eq.s32.totalorder %v267, 1
        %vm390 = vcmp.eq.s32.totalorder %v268, 1
        %v391 = vsel %vm389, %v387, -inf
        %v392 = vsel %vm390, %v388, -inf
        %v393 = vmax.f32 %v382, %v226
        %v394 = vmax.f32 %v383, %v227
        %v395 = vmax.f32 %v393, %v391
        %v396 = vmax.f32 %v394, %v392
        %399 = vrot.lane.b32.xlu0 %v373, 120
        %v400 = vpop.permute.xlu0 %399
        %401 = vrot.lane.b32.xlu0 %v374, 120
        %v402 = vpop.permute.xlu0 %401
        %v405 = vrot.slane %v400, 7
        %v406 = vrot.slane %v402, 7
        %v407 = vsel %vm377, %v405, %v406
        %v408 = vsel %vm377, %v406, %v405
        %v409 = vmul.f32 %v408, %v265
        %v410 = vmul.f32 %v407, %v266
        %v411 = vrot.slane %v400, 1
        %v412 = vrot.slane %v402, 1
        %v413 = vsel %vm386, %v411, %v412
        %v414 = vsel %vm386, %v412, %v411
        %v415 = vmul.f32 %v413, %v269
        %v416 = vmul.f32 %v414, %v270
        %417 = vrot.lane.b32.xlu0 %v373, 114
        %v418 = vpop.permute.xlu0 %417
        %419 = vrot.lane.b32.xlu0 %v374, 114
        %v420 = vpop.permute.xlu0 %419
        %v423 = vrot.slane %v418, 6
        %v424 = vrot.slane %v420, 6
        %vm425 = vcmp.lt.s32.totalorder %v229, 2
        %v426 = vsel %vm425, %v423, %v424
        %v427 = vsel %vm425, %v424, %v423
        %v428 = vmul.f32 %v427, %v273
        %v429 = vmul.f32 %v426, %v274
        %v430 = vrot.slane %v418, 7
        %v431 = vrot.slane %v420, 7
        %v432 = vsel %vm377, %v430, %v431
        %v433 = vsel %vm377, %v431, %v430
        %v434 = vmul.f32 %v433, %v265
        %v435 = vmul.f32 %v432, %v266
        %v436 = vrot.slane %v418, 1
        %v437 = vrot.slane %v420, 1
        %v438 = vsel %vm386, %v436, %v437
        %v439 = vsel %vm386, %v437, %v436
        %v440 = vmul.f32 %v438, %v269
        %v441 = vmul.f32 %v439, %v270
        %v442 = vrot.slane %v418, 2
        %v443 = vrot.slane %v420, 2
        %vm444 = vcmp.lt.s32.totalorder %v229, 6
        %v445 = vsel %vm444, %v442, %v443
        %v446 = vsel %vm444, %v443, %v442
        %v447 = vmul.f32 %v445, %v277
        %v448 = vmul.f32 %v446, %v278
        %449 = vrot.lane.b32.xlu0 %v373, 126
        %v450 = vpop.permute.xlu0 %449
        %451 = vrot.lane.b32.xlu0 %v374, 126
        %v452 = vpop.permute.xlu0 %451
        %457 = vrot.lane.b32.xlu0 %v415, 12
        %v458 = vpop.permute.xlu0 %457
        %459 = vrot.lane.b32.xlu0 %v416, 12
        %v460 = vpop.permute.xlu0 %459
        %465 = vrot.lane.b32.xlu0 %v428, 18
        %v466 = vpop.permute.xlu0 %465
        %467 = vrot.lane.b32.xlu0 %v429, 18
        %v468 = vpop.permute.xlu0 %467
        %473 = vrot.lane.b32.xlu0 %v434, 22
        %v474 = vpop.permute.xlu0 %473
        %475 = vrot.lane.b32.xlu0 %v435, 22
        %v476 = vpop.permute.xlu0 %475
        %479 = vrot.lane.b32.xlu0 %v373, 12
        %v480 = vpop.permute.xlu0 %479
        %481 = vrot.lane.b32.xlu0 %v374, 12
        %v482 = vpop.permute.xlu0 %481
        %487 = vrot.lane.b32.xlu0 %v440, 30
        %v488 = vpop.permute.xlu0 %487
        %489 = vrot.lane.b32.xlu0 %v441, 30
        %v490 = vpop.permute.xlu0 %489
        %495 = vrot.lane.b32.xlu0 %v447, 34
        %v496 = vpop.permute.xlu0 %495
        %497 = vrot.lane.b32.xlu0 %v448, 34
        %v498 = vpop.permute.xlu0 %497
        %503 = vrot.lane.b32.xlu0 %v395, 38
        %v504 = vpop.permute.xlu0 %503
        %505 = vrot.lane.b32.xlu0 %v396, 38
        %v506 = vpop.permute.xlu0 %505
        %vm509 = vcmask 48128
        %v510 = vsel %vm509, %v409, %v450
        %v511 = vsel %vm509, %v410, %v452
        %vm512 = vcmask 97280
        %v513 = vsel %vm512, %v510, %v458
        %v514 = vsel %vm512, %v511, %v460
        %vm515 = vcmask 146432
        %v516 = vsel %vm515, %v513, %v466
        %v517 = vsel %vm515, %v514, %v468
        %vm518 = vcmask 179200
        %v519 = vsel %vm518, %v516, %v474
        %v520 = vsel %vm518, %v517, %v476
        %vm521 = vcmask 211968
        %v522 = vsel %vm521, %v519, %v480
        %v523 = vsel %vm521, %v520, %v482
        %vm524 = vcmask 244736
        %v525 = vsel %vm524, %v522, %v488
        %v526 = vsel %vm524, %v523, %v490
        %vm527 = vcmask 277504
        %v528 = vsel %vm527, %v525, %v496
        %v529 = vsel %vm527, %v526, %v498
        %vm530 = vcmask 310272
        %v531 = vsel %vm530, %v528, %v504
        %v532 = vsel %vm530, %v529, %v506
        %v533 = vld [vmem:[%s3] sm:$0xff]
        %v534 = vld [vmem:[%s3 + $0x8] sm:$0xff]
        %v535 = vld [vmem:[%s3 + $0x10] sm:$0xff]
        %v536 = vld [vmem:[%s3 + $0x18] sm:$0xff]
        %v537 = vld [vmem:[%s3 + $0x20] sm:$0xff]
        %v538 = vld [vmem:[%s3 + $0x28] sm:$0x3]
        %v539 = vld [vmem:[%s4] sm:$0x1]
        %v541 = vlaneseq
        %v542 = vshrl.u32 %v541, 7
        %v543 = vsub.s32 0, %v542
        %v544 = vrot.slane %v539, %v543
        %vm546 = vcmask 343040
        %v548 = vsel %vm546, %v531, 0
        %v551 = vsel %vm546, %v532, 0
        %vm553 = vcmask 1041408
        %v555 = vsel %vm553, %v538, 0
        %557 = vmatprep.subr.mxu0 0.0
        %558 = vmatpush1.msra.mxu0 %v533
        %559 = vmatprep.subr.mxu0 0.0
        %560 = vmatpush1.msra.mxu0 %v534
        %561 = vmatprep.subr.mxu0 0.0
        %562 = vmatpush1.msra.mxu0 %v535
        %563 = vmatprep.subr.mxu0 0.0
        %564 = vmatpush1.msra.mxu0 %v536
        %565 = vmatprep.subr.mxu0 0.0
        %566 = vmatpush1.msra.mxu0 %v537
        %567 = vmatprep.subr.mxu0 0.0
        %568 = vmatpush1.msra.mxu0 %v555
        %569 = vmatprep.subr.mxu0 0.0
        %570 = vmatpush1.msra.mxu0 0.0
        %571 = vmatprep.subr.mxu0 0.0
        %572 = vmatpush1.msra.mxu0 0.0
        %573 = vmatprep.subr.mxu0 0.0
        %574 = vmatpush1.msra.mxu0 0.0
        %575 = vmatprep.subr.mxu0 0.0
        %576 = vmatpush1.msra.mxu0 0.0
        %577 = vmatprep.subr.mxu0 0.0
        %578 = vmatpush1.msra.mxu0 0.0
        %579 = vmatprep.subr.mxu0 0.0
        %580 = vmatpush1.msra.mxu0 0.0
        %581 = vmatprep.subr.mxu0 0.0
        %582 = vmatpush1.msra.mxu0 0.0
        %583 = vmatprep.subr.mxu0 0.0
        %584 = vmatpush1.msra.mxu0 0.0
        %585 = vmatprep.subr.mxu0 0.0
        %586 = vmatpush1.msra.mxu0 0.0
        %587 = vmatprep.subr.mxu0 0.0
        %588 = vmatpush1.msra.mxu0 0.0
        %589 = vmatprep.subr.mxu0 0.0
        %590 = vmatpush1.msra.mxu0 0.0
        %591 = vmatprep.subr.mxu0 0.0
        %592 = vmatpush1.msra.mxu0 0.0
        %593 = vmatprep.subr.mxu0 0.0
        %594 = vmatpush1.msra.mxu0 0.0
        %595 = vmatprep.subr.mxu0 0.0
        %596 = vmatpush1.msra.mxu0 0.0
        %597 = vmatprep.subr.mxu0 0.0
        %598 = vmatpush1.msra.mxu0 0.0
        %599 = vmatprep.subr.mxu0 0.0
        %600 = vmatpush1.msra.mxu0 0.0
        %601 = vmatprep.subr.mxu0 0.0
        %602 = vmatpush1.msra.mxu0 0.0
        %603 = vmatprep.subr.mxu0 0.0
        %604 = vmatpush1.msra.mxu0 0.0
        %605 = vmatprep.subr.mxu0 0.0
        %606 = vmatpush1.msra.mxu0 0.0
        %607 = vmatprep.subr.mxu0 0.0
        %608 = vmatpush1.msra.mxu0 0.0
        %609 = vmatprep.subr.mxu0 0.0
        %610 = vmatpush1.msra.mxu0 0.0
        %611 = vmatprep.subr.mxu0 0.0
        %612 = vmatpush1.msra.mxu0 0.0
        %613 = vmatprep.subr.mxu0 0.0
        %614 = vmatpush1.msra.mxu0 0.0
        %615 = vmatprep.subr.mxu0 0.0
        %616 = vmatpush1.msra.mxu0 0.0
        %617 = vmatprep.subr.mxu0 0.0
        %618 = vmatpush1.msra.mxu0 0.0
        %619 = vmatprep.subr.mxu0 0.0
        %620 = vmatpush1.msra.mxu0 0.0
        %621 = vmatprep.mubr.f32.mxu0 0.0
        %622 = vmatmul.mubr.f32.gmra.mrb[0].mxu0 %v548
        %v623 = vpop.f32.mrb[0].mxu0
        %v624 = vadd.f32 %v544, %v623
        %v625 = vpop.f32.mrb[0].mxu0
        %626 = vmatprep.mubr.f32.mxu0 0.0
        %627 = vmatmul.mubr.f32.gmra.mrb[0].mxu0 %v551
        %v628 = vpop.f32.mrb[0].mxu0
        %v629 = vadd.f32 %v544, %v628
        %v630 = vpop.f32.mrb[0].mxu0
        %631 = vdwg.mxu0
        %v632 = vmax.f32 %v624, 0.0
        %v633 = vmax.f32 %v629, 0.0
        %636 = vrot.lane.b32.xlu0 %v632, 8
        %v637 = vpop.permute.xlu0 %636
        %638 = vrot.lane.b32.xlu0 %v633, 8
        %v639 = vpop.permute.xlu0 %638
        %vm642 = vcmask 64512
        %v643 = vsel %vm642, %v373, %v637
        %v644 = vsel %vm642, %v374, %v639
        %vm645 = vcmask 261120
        %646 = vst.msk [vmem:[%s218] sm:$0xff] %vm645, %v643
        %647 = vst.msk [vmem:[%s218 + $0x8] sm:$0xff] %vm645, %v644
        %s648 = sand.u32 %s137, 1
        %s649 = scalar_lea.sflag [#allocation3], %s648
        %s650 = sand.u32 %s137, 1
        %s651 = smul.addr %s650, 16
        %s652 = scalar_lea.vmem [#allocation2], %s651
        // Predicated region
        $region41: #{tpu_custom_call.1} parent=39 // pred_check
          %p653 = pneg %p147
        $region42: #{tpu_custom_call.1} parent=39 // pred_check_branch
          %655 = sbr.rel (%p653) target = $region44
        $region43: #{tpu_custom_call.1} parent=39 // pred_region
          %s656 = smul.u32 2, %s19
          %s658 = ssub.s32 256, 256
          %659 = vsyncadd %s649, %s658
          %s660 = smul.addr %s656, 128
          %s661 = scalar_lea.hbm %s5, %s660
          %s662 = sshll.u32 %s652, 4
          %s663 = int_to_ptr.vmem [resolvable:$true] %s662
          %668 = dma.vmem_to_hbm [thread:$0]  %s663, 256, %s661, %s649, 128, 128, 8
        $region44: #{tpu_custom_call.1} parent=39 // pred_fallthru
          _
      $region40: #{tpu_custom_call.1} parent=5 // pred_fallthru
        _
      %p669 = scmp.le.s32.totalorder 2, %s14
      // Predicated region
      $region45: #{tpu_custom_call.1} parent=5 // pred_check
        %p670 = pneg %p669
      $region46: #{tpu_custom_call.1} parent=5 // pred_check_branch
        %672 = sbr.rel (%p670) target = $region48
      $region47: #{tpu_custom_call.1} parent=5 // pred_region
        %s673 = ssub.s32 %s14, 2
        // Predicated region
        $region49: #{tpu_custom_call.1} parent=47 // pred_check
          %p674 = pneg %p153
        $region50: #{tpu_custom_call.1} parent=47 // pred_check_branch
          %676 = sbr.rel (%p674) target = $region52
        $region51: #{tpu_custom_call.1} parent=47 // pred_region
          %s677 = sand.u32 %s138, 1
          %s678 = scalar_lea.sflag [#allocation3], %s677
          %s679 = sand.u32 %s138, 1
          %s680 = smul.addr %s679, 16
          %s681 = scalar_lea.vmem [#allocation2], %s680
          %682 = dma.done %s678, 256
        $region52: #{tpu_custom_call.1} parent=47 // pred_fallthru
          _
      $region48: #{tpu_custom_call.1} parent=5 // pred_fallthru
        _
    $region6: #{tpu_custom_call.1} parent=1 // loop_footer
      %s18 = sadd.s32 1, %s14
    $region7: #{tpu_custom_call.1} parent=1 // loop_footer_branch
      %13 = sbr.rel target = $region3
    $region8: #{tpu_custom_call.1} parent=1 // loop_exit
      _
    %683 = vsyncpa [#allocation3], 1
    %s684 = scalar_lea.sflag [#allocation3], 1
    %685 = vsyncpa %s684, 1

</llo_original>
